<compile_context>
chip_gen: v7x
topology: tpu7x:2x2x1
jax: 0.10.0
libtpu: 0.0.40
codegen_flags: <defaults>
</compile_context>

<pallas_src>
import jax
import jax.numpy as jnp
from jax.experimental import pallas as pl
from jax.experimental.pallas import tpu as pltpu

_LANES = 128        # vreg lane width -> last dim of the lane-dense slab
_SUBLANES = 8       # f32 sublane tiling
_ALIGN = _LANES * _SUBLANES  # 1024-element alignment => rows is a multiple of 8


def _logreg_kernel(wb_ref, x_ref, o_ref):
    # wb_ref: SMEM (2,) f32 -> [weight, bias] scalars.
    # x_ref / o_ref: (block_rows, 128) f32 VMEM tiles.
    w = wb_ref[0]
    b = wb_ref[1]
    z = x_ref[...] * w + b                        # linear: x * W + b (1 feature)
    # Exact sigmoid with a single EUP transcendental (tanh); VALU handles the
    # cheap fma.  sigmoid(z) = 0.5 * tanh(z / 2) + 0.5.
    o_ref[...] = 0.5 * jnp.tanh(0.5 * z) + 0.5


def logistic_regression_forward(x, weight, bias, *, tile_rows=2048):
    """x: [N, 1] f32, weight: [1, 1] f32, bias: [1] f32 -> [N, 1] f32."""
    if tile_rows % _SUBLANES != 0:
        raise ValueError("tile_rows must be a multiple of 8 (f32 sublane tiling)")
    n = x.shape[0]

    # Pack the two scalars into one flat SMEM array (avoids 2-D SMEM padding).
    wb = jnp.concatenate(
        [weight.reshape(-1), bias.reshape(-1)]).astype(jnp.float32)

    # Lane-dense slab.  Aligned N: zero-copy reshape.  Unaligned N: minimal pad
    # up to 1024 elements so rows is a multiple of 8.
    x_flat = x.reshape(-1).astype(jnp.float32)
    pad = (-n) % _ALIGN
    if pad:
        x_flat = jnp.pad(x_flat, (0, pad))
    rows = (n + pad) // _LANES
    x2d = x_flat.reshape(rows, _LANES)

    block_rows = min(tile_rows, rows)             # both are multiples of 8
    n_blocks = pl.cdiv(rows, block_rows)          # partial last block is fine

    out2d = pl.pallas_call(
        _logreg_kernel,
        out_shape=jax.ShapeDtypeStruct((rows, _LANES), jnp.float32),
        grid=(n_blocks,),
        in_specs=[
            pl.BlockSpec(memory_space=pltpu.MemorySpace.SMEM),      # [w, b]
            pl.BlockSpec((block_rows, _LANES), lambda i: (i, 0)),   # x tile
        ],
        out_specs=pl.BlockSpec((block_rows, _LANES), lambda i: (i, 0)),
        compiler_params=pltpu.CompilerParams(
            dimension_semantics=("parallel",),  # lets v7x split across 2 TCs
        ),
    )(wb, x2d)

    if pad:
        # Unaligned fallback: drop the padded tail (small extra copy).
        return out2d.reshape(-1)[:n].reshape(n, 1)
    # Aligned fast path: pure metadata reshape, no extra HBM pass.
    return out2d.reshape(n, 1)


if __name__ == "__main__":
    key = jax.random.PRNGKey(0)
    k_w, k_b, k_x1, k_x2, k_x3 = jax.random.split(key, 5)

    # nn.Linear(1, 1) default init: U(-1/sqrt(in), 1/sqrt(in)) with in=1.
    weight = jax.random.uniform(k_w, (1, 1), jnp.float32, -1.0, 1.0)
    bias = jax.random.uniform(k_b, (1,), jnp.float32, -1.0, 1.0)

    def ref(x):
        return jax.nn.sigmoid(x @ weight.T + bias)

    # Case 1: aligned batch (zero-copy path), default tile, single block.
    x1 = jax.random.normal(k_x1, (4096, 1), jnp.float32)
    y1 = jax.block_until_ready(logistic_regression_forward(x1, weight, bias))
    assert y1.shape == x1.shape
    assert jnp.allclose(y1, ref(x1), atol=1e-4), "mismatch vs reference (case 1)"

    # Case 2: aligned batch, multi-step grid (small tile for coverage only).
    y2 = jax.block_until_ready(
        logistic_regression_forward(x1, weight, bias, tile_rows=8))
    assert jnp.allclose(y2, ref(x1), atol=1e-4), "mismatch vs reference (case 2)"

    # Case 3: unaligned batch (pad fallback) with a partial last block.
    x3 = jax.random.normal(k_x3, (5000, 1), jnp.float32)
    y3 = jax.block_until_ready(
        logistic_regression_forward(x3, weight, bias, tile_rows=16))
    assert y3.shape == (5000, 1)
    assert jnp.allclose(y3, ref(x3), atol=1e-4), "mismatch vs reference (case 3)"

    # Case 4: tiny batch (padding-dominated path).
    x4 = jax.random.normal(k_x2, (8, 1), jnp.float32)
    y4 = jax.block_until_ready(logistic_regression_forward(x4, weight, bias))
    assert y4.shape == (8, 1)
    assert jnp.allclose(y4, ref(x4), atol=1e-4), "mismatch vs reference (case 4)"

    print("KERNEL_OK")
</pallas_src>

<mosaic_0001>
module attributes {stable_mosaic.version = 11 : i64} {
  func.func @_logreg_kernel(%arg0: i32, %arg1: memref<2xf32, #tpu.memory_space<smem>>, %arg2: memref<32x128xf32, #tpu.memory_space<vmem>>, %arg3: memref<32x128xf32, #tpu.memory_space<vmem>>) attributes {dimension_semantics = [#tpu.dimension_semantics<parallel>], iteration_bounds = array<i64: 1>, scalar_prefetch = 0 : i64, scratch_operands = 0 : i64, tpu.core_type = #tpu.core_type<tc>, window_params = [{transform_indices = @transform_0, window_bounds = array<i64: 2>}, {transform_indices = @transform_1, window_bounds = array<i64: 32, 128>}, {transform_indices = @transform_2, window_bounds = array<i64: 32, 128>}]} {
    %c0 = arith.constant 0 : index
    %0 = memref.load %arg1[%c0] : memref<2xf32, #tpu.memory_space<smem>>
    %c1 = arith.constant 1 : index
    %1 = memref.load %arg1[%c1] : memref<2xf32, #tpu.memory_space<smem>>
    %c0_0 = arith.constant 0 : index
    %c0_1 = arith.constant 0 : index
    %2 = vector.load %arg2[%c0_0, %c0_1] : memref<32x128xf32, #tpu.memory_space<vmem>>, vector<32x128xf32>
    %3 = vector.broadcast %0 : f32 to vector<32x128xf32>
    %4 = arith.mulf %2, %3 : vector<32x128xf32>
    %5 = vector.broadcast %1 : f32 to vector<32x128xf32>
    %6 = arith.addf %4, %5 : vector<32x128xf32>
    %cst = arith.constant 5.000000e-01 : f32
    %7 = vector.broadcast %cst : f32 to vector<32x128xf32>
    %8 = arith.mulf %7, %6 : vector<32x128xf32>
    %9 = math.tanh %8 : vector<32x128xf32>
    %cst_2 = arith.constant 5.000000e-01 : f32
    %10 = vector.broadcast %cst_2 : f32 to vector<32x128xf32>
    %11 = arith.mulf %10, %9 : vector<32x128xf32>
    %cst_3 = arith.constant 5.000000e-01 : f32
    %12 = vector.broadcast %cst_3 : f32 to vector<32x128xf32>
    %13 = arith.addf %11, %12 : vector<32x128xf32>
    %c0_4 = arith.constant 0 : index
    %c0_5 = arith.constant 0 : index
    %14 = vector.load %arg3[%c0_4, %c0_5] : memref<32x128xf32, #tpu.memory_space<vmem>>, vector<32x128xf32>
    tpu.vector_store %arg3[%c0_4, %c0_5], %13 {strides = array<i32>} : memref<32x128xf32, #tpu.memory_space<vmem>>, vector<32x128xf32>,
    return
  }
  func.func @transform_0(%arg0: i32) -> i32 {
    %c0_i32 = arith.constant 0 : i32
    %c0_i32_0 = arith.constant 0 : i32
    return %c0_i32 : i32
  }
  func.func @transform_1(%arg0: i32) -> (i32, i32) {
    %c0_i32 = arith.constant 0 : i32
    %c0_i32_0 = arith.constant 0 : i32
    return %arg0, %c0_i32 : i32, i32
  }
  func.func @transform_2(%arg0: i32) -> (i32, i32) {
    %c0_i32 = arith.constant 0 : i32
    %c0_i32_0 = arith.constant 0 : i32
    return %arg0, %c0_i32 : i32, i32
  }
}

</mosaic_0001>

<llo_original>
// kernel: tpu_custom_call.1
$region0: #{tpu_custom_call.1}
  #allocation0 [shape = 'u32[]', space=smem, size = 0x4, offset = 0x4, fixed_abs, tag = 'smem constant byte address 0x4 - core index']
  #allocation1 [shape = 'u32[144,128]{1,0:T(1,128)}', space=vmem, size = 0x12000, scoped, tag = 'internal scratch']
  %s0 = inlined_call_operand.hbm [shape: f32[2], index: 0, kind: input, shape index: {}]
  %s1 = inlined_call_operand.hbm [shape: f32[32,128], index: 1, kind: input, shape index: {}]
  %s2 = inlined_call_operand.hbm [shape: f32[32,128], index: 2, kind: output, shape index: {}]
  %s3 = sld [smem:[#allocation0]]
  $region26: #{tpu_custom_call.1} parent=0
    _
  %s5 = ssub.s32 1, %s3
  %s6 = scalar_select 0, %s5, %s3
  $region1: #{tpu_custom_call.1} parent=0
    #allocation2 [shape = 'u8[512]{0}', space=smem, size = 0x200, scoped, tag = 'input window, operand 0, single buffered']
    #allocation3 [shape = 's32[1]{0}', space=sflag, size = 0x4, scoped, tag = 'scoped memory for tpu_custom_call.1']
    #allocation4 [shape = 's32[1]{0}', space=sflag, size = 0x4, scoped, tag = 'scoped memory for tpu_custom_call.1']
    #allocation5 [shape = 's32[1]{0}', space=sflag, size = 0x4, scoped, tag = 'scoped memory for tpu_custom_call.1']
    #allocation6 [shape = 'u8[16384]{0}', space=vmem, size = 0x4000, scoped, tag = 'input window, operand 1, single buffered']
    #allocation7 [shape = 'u8[16384]{0}', space=vmem, size = 0x4000, scoped, tag = 'output window, operand 0, single buffered']
    %7 = vsyncpa [#allocation5], 0
    %8 = vsyncpa [#allocation3], 0
    %9 = vsyncpa [#allocation4], 0
    // Predicated region
    $region2: #{tpu_custom_call.1} parent=1 // pred_check
      _
    $region3: #{tpu_custom_call.1} parent=1 // pred_check_branch
      %11 = sbr.rel (0) target = $region5
    $region4: #{tpu_custom_call.1} parent=1 // pred_region
      %s13 = ssub.s32 16, 16
      %14 = vsyncadd [#allocation5], %s13
      %17 = dma.hbm_to_smem %s0, 16, [#allocation2], [#allocation5]
    $region5: #{tpu_custom_call.1} parent=1 // pred_fallthru
      _
    // Predicated region
    $region6: #{tpu_custom_call.1} parent=1 // pred_check
      _
    $region7: #{tpu_custom_call.1} parent=1 // pred_check_branch
      %19 = sbr.rel (0) target = $region9
    $region8: #{tpu_custom_call.1} parent=1 // pred_region
      %s21 = ssub.s32 512, 512
      %22 = vsyncadd [#allocation3], %s21
      %s23 = sshll.u32 [#allocation6], 4
      %s24 = int_to_ptr.vmem [resolvable:$true] %s23
      %29 = dma.hbm_to_vmem [thread:$0]  %s1, 512, %s24, [#allocation3], 128, 128, 8
    $region9: #{tpu_custom_call.1} parent=1 // pred_fallthru
      _
    // Predicated region
    $region10: #{tpu_custom_call.1} parent=1 // pred_check
      _
    $region11: #{tpu_custom_call.1} parent=1 // pred_check_branch
      %31 = sbr.rel (0) target = $region13
    $region12: #{tpu_custom_call.1} parent=1 // pred_region
      %32 = dma.done [#allocation5], 16
    $region13: #{tpu_custom_call.1} parent=1 // pred_fallthru
      _
    // Predicated region
    $region14: #{tpu_custom_call.1} parent=1 // pred_check
      _
    $region15: #{tpu_custom_call.1} parent=1 // pred_check_branch
      %34 = sbr.rel (0) target = $region17
    $region16: #{tpu_custom_call.1} parent=1 // pred_region
      %35 = dma.done [#allocation3], 512
    $region17: #{tpu_custom_call.1} parent=1 // pred_fallthru
      _
    %36 = sfence
    %s37 = sld [smem:[#allocation2]]
    %s38 = sld [smem:[#allocation2 + $0x1]]
    %v39 = vld [vmem:[#allocation6] sm:$0xff]
    %v40 = vld [vmem:[#allocation6 + $0x8] sm:$0xff]
    %v41 = vld [vmem:[#allocation6 + $0x10] sm:$0xff]
    %v42 = vld [vmem:[#allocation6 + $0x18] sm:$0xff]
    %v43 = vstv %s37
    %v44 = vmul.f32 %v39, %v43
    %v45 = vmul.f32 %v40, %v43
    %v46 = vmul.f32 %v41, %v43
    %v47 = vmul.f32 %v42, %v43
    %v48 = vstv %s38
    %v49 = vadd.f32 %v44, %v48
    %v50 = vadd.f32 %v45, %v48
    %v51 = vadd.f32 %v46, %v48
    %v52 = vadd.f32 %v47, %v48
    %v53 = vmul.f32 %v49, 0.5
    %v54 = vmul.f32 %v50, 0.5
    %v55 = vmul.f32 %v51, 0.5
    %v56 = vmul.f32 %v52, 0.5
    %v57 = vtanh.pop %v53
    %v58 = vtanh.pop %v54
    %v59 = vtanh.pop %v55
    %v60 = vtanh.pop %v56
    %v61 = vmul.f32 %v57, 0.5
    %v62 = vmul.f32 %v58, 0.5
    %v63 = vmul.f32 %v59, 0.5
    %v64 = vmul.f32 %v60, 0.5
    %v65 = vadd.f32 %v61, 0.5
    %v66 = vadd.f32 %v62, 0.5
    %v67 = vadd.f32 %v63, 0.5
    %v68 = vadd.f32 %v64, 0.5
    %69 = vst [vmem:[#allocation7] sm:$0xff] %v65
    %70 = vst [vmem:[#allocation7 + $0x8] sm:$0xff] %v66
    %71 = vst [vmem:[#allocation7 + $0x10] sm:$0xff] %v67
    %72 = vst [vmem:[#allocation7 + $0x18] sm:$0xff] %v68
    // Predicated region
    $region18: #{tpu_custom_call.1} parent=1 // pred_check
      _
    $region19: #{tpu_custom_call.1} parent=1 // pred_check_branch
      %74 = sbr.rel (0) target = $region21
    $region20: #{tpu_custom_call.1} parent=1 // pred_region
      %s76 = ssub.s32 512, 512
      %77 = vsyncadd [#allocation4], %s76
      %s78 = sshll.u32 [#allocation7], 4
      %s79 = int_to_ptr.vmem [resolvable:$true] %s78
      %84 = dma.vmem_to_hbm [thread:$0]  %s79, 512, %s2, [#allocation4], 128, 128, 8
    $region21: #{tpu_custom_call.1} parent=1 // pred_fallthru
      _
    // Predicated region
    $region22: #{tpu_custom_call.1} parent=1 // pred_check
      _
    $region23: #{tpu_custom_call.1} parent=1 // pred_check_branch
      %86 = sbr.rel (0) target = $region25
    $region24: #{tpu_custom_call.1} parent=1 // pred_region
      %87 = dma.done [#allocation4], 512
    $region25: #{tpu_custom_call.1} parent=1 // pred_fallthru
      _
    %88 = vsyncpa [#allocation3], 1
    %89 = vsyncpa [#allocation4], 1
    %90 = vsyncpa [#allocation5], 1

</llo_original>
